<compile_context>
chip_gen: v7x
topology: tpu7x:2x2x1
jax: 0.10.0
libtpu: 0.0.40
codegen_flags: <defaults>
</compile_context>

<pallas_src>
import jax
import jax.numpy as jnp
from jax.experimental import pallas as pl
from jax.experimental.pallas import tpu as pltpu


def _round_up(x, m):
    return ((x + m - 1) // m) * m


def fc_model_kernel(x_ref,
                    w1_ref, b1_ref,
                    w2_ref, b2_ref,
                    w3_ref, b3_ref,
                    w4_ref, b4_ref,
                    o_ref):
    """Whole MLP forward for one batch tile.

    x_ref is the untransposed (tile_b, D_in) f32 block; all activations are
    kept in the lane-dense [features, batch] layout.
    """
    xb = x_ref[...].astype(jnp.bfloat16)                       # (tile_b, D_in) bf16

    # Layer 1: contract the last dim of both operands -> (n1, tile_b).
    h = jax.lax.dot_general(
        w1_ref[...], xb,
        dimension_numbers=(((1,), (1,)), ((), ())),
        preferred_element_type=jnp.float32) + b1_ref[...]
    h = jnp.maximum(h, 0.0).astype(jnp.bfloat16)               # (n1, tile_b)

    h = jnp.dot(w2_ref[...], h, preferred_element_type=jnp.float32) + b2_ref[...]
    h = jnp.maximum(h, 0.0).astype(jnp.bfloat16)               # (n2, tile_b)

    h = jnp.dot(w3_ref[...], h, preferred_element_type=jnp.float32) + b3_ref[...]
    h = jnp.maximum(h, 0.0)                                    # (n3, tile_b) f32

    # Final Linear(n3, 1): VPU multiply + sublane reduction (no MXU needed).
    out = jnp.sum(h * w4_ref[...], axis=0, keepdims=True) + b4_ref[...]  # (1, tile_b)
    o_ref[0, :, :] = out.astype(o_ref.dtype)


def _choose_tile_b(B):
    """Lane-multiple batch tile; >=2 tiles when possible (v7x megacore)."""
    lanes = _round_up(B, 128)
    if lanes <= 128:
        return 128
    # At least 2 tiles so the ("parallel",) grid axis spans both v7x
    # TensorCores; capped at 4096 lanes/tile to stay inside scoped VMEM on
    # every generation (with vmem_limit_bytes=32 MiB below).
    return min(4096, _round_up(pl.cdiv(lanes, 2), 128))


def fc_model_forward(x, params, *, tile_b=None):
    """x: [B, D_in] float32 -> [B, 1] float32."""
    B, D_in = x.shape
    w1, b1 = params["w1"], params["b1"]
    w2, b2 = params["w2"], params["b2"]
    w3, b3 = params["w3"], params["b3"]
    w4, b4 = params["w4"], params["b4"]

    if tile_b is None:
        tile_b = _choose_tile_b(B)
    assert tile_b % 128 == 0
    num_tiles = pl.cdiv(B, tile_b)

    # Small resident params: whole-array blocks with a constant index_map.
    full = lambda a: pl.BlockSpec(a.shape, lambda i: (0, 0))

    out = pl.pallas_call(
        fc_model_kernel,
        out_shape=jax.ShapeDtypeStruct((num_tiles, 1, tile_b), jnp.float32),
        grid_spec=pltpu.PrefetchScalarGridSpec(
            num_scalar_prefetch=0,
            grid=(num_tiles,),
            in_specs=[
                pl.BlockSpec((tile_b, D_in), lambda i: (i, 0)),   # x batch tile (f32)
                full(w1), full(b1),
                full(w2), full(b2),
                full(w3), full(b3),
                full(w4), full(b4),
            ],
            out_specs=pl.BlockSpec((1, 1, tile_b), lambda i: (i, 0, 0)),
        ),
        compiler_params=pltpu.CompilerParams(
            dimension_semantics=("parallel",),
            vmem_limit_bytes=32 * 1024 * 1024,
        ),
    )(x, w1, b1, w2, b2, w3, b3, w4, b4)

    # (num_tiles, 1, tile_b) lane-dense slab of contiguous batch chunks
    # -> (B, 1), dropping batch padding lanes.
    return out.reshape(num_tiles * tile_b, 1)[:B]


def init_params(key, d_in, n1, n2, n3):
    """nn.Linear-style U(-1/sqrt(fan_in), +1/sqrt(fan_in)) init.

    Layers 1-3: weights in PyTorch (out_features, in_features) layout, bf16.
    Layer 4:    weight stored as an (n3, 1) f32 column (used by the VPU reduce).
    Biases:     f32 columns (out_features, 1).
    """
    def linear(k, fan_in, fan_out):
        kw, kb = jax.random.split(k)
        bound = 1.0 / jnp.sqrt(fan_in)
        w = jax.random.uniform(kw, (fan_out, fan_in), jnp.float32, -bound, bound)
        b = jax.random.uniform(kb, (fan_out, 1), jnp.float32, -bound, bound)
        return w, b

    k1, k2, k3, k4 = jax.random.split(key, 4)
    w1, b1 = linear(k1, d_in, n1)
    w2, b2 = linear(k2, n1, n2)
    w3, b3 = linear(k3, n2, n3)
    w4, b4 = linear(k4, n3, 1)
    return dict(
        w1=w1.astype(jnp.bfloat16), b1=b1,
        w2=w2.astype(jnp.bfloat16), b2=b2,
        w3=w3.astype(jnp.bfloat16), b3=b3,
        w4=w4.T, b4=b4,                       # (n3, 1) f32, (1, 1) f32
    )


def fc_model_ref(x, p):
    """Pure-JAX reference using the same bf16-operand / f32-accumulate recipe."""
    xb = x.astype(jnp.bfloat16)                                # (B, D_in)
    h = jax.lax.dot_general(p["w1"], xb,
                            dimension_numbers=(((1,), (1,)), ((), ())),
                            preferred_element_type=jnp.float32) + p["b1"]
    h = jnp.maximum(h, 0.0).astype(jnp.bfloat16)
    h = jnp.dot(p["w2"], h, preferred_element_type=jnp.float32) + p["b2"]
    h = jnp.maximum(h, 0.0).astype(jnp.bfloat16)
    h = jnp.dot(p["w3"], h, preferred_element_type=jnp.float32) + p["b3"]
    h = jnp.maximum(h, 0.0)
    out = jnp.sum(h * p["w4"], axis=0, keepdims=True) + p["b4"]
    return out.T                                               # (B, 1)


if __name__ == "__main__":
    # Small shapes consistent with the module's forward:
    # len_max_molec1Hot=256, layer1=128, layer2=64, layer3=32, batch=16.
    B, D_IN, N1, N2, N3 = 16, 256, 128, 64, 32

    key = jax.random.PRNGKey(0)
    kx, kp = jax.random.split(key)
    x = jax.random.normal(kx, (B, D_IN), jnp.float32)
    params = init_params(kp, D_IN, N1, N2, N3)

    out = fc_model_forward(x, params)
    out = jax.block_until_ready(out)

    ref = fc_model_ref(x, params)
    assert out.shape == (B, 1)
    assert jnp.allclose(out, ref, atol=1e-3, rtol=1e-3), "mismatch vs reference"

    print("KERNEL_OK")
</pallas_src>

<mosaic_0001>
module attributes {stable_mosaic.version = 11 : i64} {
  func.func @fc_model_kernel(%arg0: i32, %arg1: memref<128x256xf32, #tpu.memory_space<vmem>>, %arg2: memref<128x256xbf16, #tpu.memory_space<vmem>>, %arg3: memref<128x1xf32, #tpu.memory_space<vmem>>, %arg4: memref<64x128xbf16, #tpu.memory_space<vmem>>, %arg5: memref<64x1xf32, #tpu.memory_space<vmem>>, %arg6: memref<32x64xbf16, #tpu.memory_space<vmem>>, %arg7: memref<32x1xf32, #tpu.memory_space<vmem>>, %arg8: memref<32x1xf32, #tpu.memory_space<vmem>>, %arg9: memref<1x1xf32, #tpu.memory_space<vmem>>, %arg10: memref<1x1x128xf32, #tpu.memory_space<vmem>>) attributes {dimension_semantics = [#tpu.dimension_semantics<parallel>], iteration_bounds = array<i64: 1>, scalar_prefetch = 0 : i64, scratch_operands = 0 : i64, tpu.core_type = #tpu.core_type<tc>, window_params = [{transform_indices = @transform_0, window_bounds = array<i64: 128, 256>}, {pipeline_mode = #tpu.pipeline_mode<synchronous>, transform_indices = @transform_1, window_bounds = array<i64: 128, 256>}, {pipeline_mode = #tpu.pipeline_mode<synchronous>, transform_indices = @transform_2, window_bounds = array<i64: 128, 1>}, {pipeline_mode = #tpu.pipeline_mode<synchronous>, transform_indices = @transform_3, window_bounds = array<i64: 64, 128>}, {pipeline_mode = #tpu.pipeline_mode<synchronous>, transform_indices = @transform_4, window_bounds = array<i64: 64, 1>}, {pipeline_mode = #tpu.pipeline_mode<synchronous>, transform_indices = @transform_5, window_bounds = array<i64: 32, 64>}, {pipeline_mode = #tpu.pipeline_mode<synchronous>, transform_indices = @transform_6, window_bounds = array<i64: 32, 1>}, {pipeline_mode = #tpu.pipeline_mode<synchronous>, transform_indices = @transform_7, window_bounds = array<i64: 32, 1>}, {pipeline_mode = #tpu.pipeline_mode<synchronous>, transform_indices = @transform_8, window_bounds = array<i64: 1, 1>}, {transform_indices = @transform_9, window_bounds = array<i64: 1, 1, 128>}]} {
    %c0 = arith.constant 0 : index
    %c0_0 = arith.constant 0 : index
    %0 = vector.load %arg1[%c0, %c0_0] : memref<128x256xf32, #tpu.memory_space<vmem>>, vector<128x256xf32>
    %1 = arith.truncf %0 : vector<128x256xf32> to vector<128x256xbf16>
    %c0_1 = arith.constant 0 : index
    %c0_2 = arith.constant 0 : index
    %2 = vector.load %arg2[%c0_1, %c0_2] : memref<128x256xbf16, #tpu.memory_space<vmem>>, vector<128x256xbf16>
    %cst = arith.constant dense<0.000000e+00> : vector<128x128xf32>
    %3 = tpu.matmul %2, %1, %cst {dimension_numbers = #tpu.dot_dimension_numbers<[1], [1], [0], [0], [0, 0, 1, 0], [], []>} : vector<128x256xbf16>, vector<128x256xbf16>, vector<128x128xf32> -> vector<128x128xf32>
    %c0_3 = arith.constant 0 : index
    %c0_4 = arith.constant 0 : index
    %4 = vector.load %arg3[%c0_3, %c0_4] : memref<128x1xf32, #tpu.memory_space<vmem>>, vector<128x1xf32>
    %5 = vector.broadcast %4 : vector<128x1xf32> to vector<128x128xf32>
    %6 = arith.addf %3, %5 : vector<128x128xf32>
    %cst_5 = arith.constant 0.000000e+00 : f32
    %7 = vector.broadcast %cst_5 : f32 to vector<128x128xf32>
    %8 = arith.maximumf %6, %7 : vector<128x128xf32>
    %9 = arith.truncf %8 : vector<128x128xf32> to vector<128x128xbf16>
    %c0_6 = arith.constant 0 : index
    %c0_7 = arith.constant 0 : index
    %10 = vector.load %arg4[%c0_6, %c0_7] : memref<64x128xbf16, #tpu.memory_space<vmem>>, vector<64x128xbf16>
    %cst_8 = arith.constant dense<0.000000e+00> : vector<64x128xf32>
    %11 = tpu.matmul %10, %9, %cst_8 {dimension_numbers = #tpu.dot_dimension_numbers<[1], [0], [0], [1], [0, 0, 1, 1], [], []>} : vector<64x128xbf16>, vector<128x128xbf16>, vector<64x128xf32> -> vector<64x128xf32>
    %c0_9 = arith.constant 0 : index
    %c0_10 = arith.constant 0 : index
    %12 = vector.load %arg5[%c0_9, %c0_10] : memref<64x1xf32, #tpu.memory_space<vmem>>, vector<64x1xf32>
    %13 = vector.broadcast %12 : vector<64x1xf32> to vector<64x128xf32>
    %14 = arith.addf %11, %13 : vector<64x128xf32>
    %cst_11 = arith.constant 0.000000e+00 : f32
    %15 = vector.broadcast %cst_11 : f32 to vector<64x128xf32>
    %16 = arith.maximumf %14, %15 : vector<64x128xf32>
    %17 = arith.truncf %16 : vector<64x128xf32> to vector<64x128xbf16>
    %c0_12 = arith.constant 0 : index
    %c0_13 = arith.constant 0 : index
    %18 = vector.load %arg6[%c0_12, %c0_13] : memref<32x64xbf16, #tpu.memory_space<vmem>>, vector<32x64xbf16>
    %cst_14 = arith.constant dense<0.000000e+00> : vector<32x128xf32>
    %19 = tpu.matmul %18, %17, %cst_14 {dimension_numbers = #tpu.dot_dimension_numbers<[1], [0], [0], [1], [0, 0, 1, 1], [], []>} : vector<32x64xbf16>, vector<64x128xbf16>, vector<32x128xf32> -> vector<32x128xf32>
    %c0_15 = arith.constant 0 : index
    %c0_16 = arith.constant 0 : index
    %20 = vector.load %arg7[%c0_15, %c0_16] : memref<32x1xf32, #tpu.memory_space<vmem>>, vector<32x1xf32>
    %21 = vector.broadcast %20 : vector<32x1xf32> to vector<32x128xf32>
    %22 = arith.addf %19, %21 : vector<32x128xf32>
    %cst_17 = arith.constant 0.000000e+00 : f32
    %23 = vector.broadcast %cst_17 : f32 to vector<32x128xf32>
    %24 = arith.maximumf %22, %23 : vector<32x128xf32>
    %c0_18 = arith.constant 0 : index
    %c0_19 = arith.constant 0 : index
    %25 = vector.load %arg8[%c0_18, %c0_19] : memref<32x1xf32, #tpu.memory_space<vmem>>, vector<32x1xf32>
    %26 = vector.broadcast %25 : vector<32x1xf32> to vector<32x128xf32>
    %27 = arith.mulf %24, %26 : vector<32x128xf32>
    %cst_20 = arith.constant dense<0.000000e+00> : vector<128xf32>
    %28 = vector.multi_reduction <add>, %27, %cst_20 [0] : vector<32x128xf32> to vector<128xf32>
    %29 = vector.shape_cast %28 : vector<128xf32> to vector<1x128xf32>
    %c0_21 = arith.constant 0 : index
    %c0_22 = arith.constant 0 : index
    %30 = vector.load %arg9[%c0_21, %c0_22] : memref<1x1xf32, #tpu.memory_space<vmem>>, vector<1x1xf32>
    %31 = vector.broadcast %30 : vector<1x1xf32> to vector<1x128xf32>
    %32 = arith.addf %29, %31 : vector<1x128xf32>
    %c0_23 = arith.constant 0 : index
    %c0_24 = arith.constant 0 : index
    %c0_25 = arith.constant 0 : index
    %33 = vector.load %arg10[%c0_23, %c0_24, %c0_25] : memref<1x1x128xf32, #tpu.memory_space<vmem>>, vector<1x1x128xf32>
    %34 = vector.shape_cast %33 : vector<1x1x128xf32> to vector<1x128xf32>
    %35 = vector.shape_cast %32 : vector<1x128xf32> to vector<1x1x128xf32>
    tpu.vector_store %arg10[%c0_23, %c0_24, %c0_25], %35 {strides = array<i32>} : memref<1x1x128xf32, #tpu.memory_space<vmem>>, vector<1x1x128xf32>,
    return
  }
  func.func @transform_0(%arg0: i32) -> (i32, i32) {
    %c0_i32 = arith.constant 0 : i32
    %c0_i32_0 = arith.constant 0 : i32
    return %arg0, %c0_i32 : i32, i32
  }
  func.func @transform_1(%arg0: i32) -> (i32, i32) {
    %c0_i32 = arith.constant 0 : i32
    %c0_i32_0 = arith.constant 0 : i32
    %c0_i32_1 = arith.constant 0 : i32
    return %c0_i32, %c0_i32_0 : i32, i32
  }
  func.func @transform_2(%arg0: i32) -> (i32, i32) {
    %c0_i32 = arith.constant 0 : i32
    %c0_i32_0 = arith.constant 0 : i32
    %c0_i32_1 = arith.constant 0 : i32
    return %c0_i32, %c0_i32_0 : i32, i32
  }
  func.func @transform_3(%arg0: i32) -> (i32, i32) {
    %c0_i32 = arith.constant 0 : i32
    %c0_i32_0 = arith.constant 0 : i32
    %c0_i32_1 = arith.constant 0 : i32
    return %c0_i32, %c0_i32_0 : i32, i32
  }
  func.func @transform_4(%arg0: i32) -> (i32, i32) {
    %c0_i32 = arith.constant 0 : i32
    %c0_i32_0 = arith.constant 0 : i32
    %c0_i32_1 = arith.constant 0 : i32
    return %c0_i32, %c0_i32_0 : i32, i32
  }
  func.func @transform_5(%arg0: i32) -> (i32, i32) {
    %c0_i32 = arith.constant 0 : i32
    %c0_i32_0 = arith.constant 0 : i32
    %c0_i32_1 = arith.constant 0 : i32
    return %c0_i32, %c0_i32_0 : i32, i32
  }
  func.func @transform_6(%arg0: i32) -> (i32, i32) {
    %c0_i32 = arith.constant 0 : i32
    %c0_i32_0 = arith.constant 0 : i32
    %c0_i32_1 = arith.constant 0 : i32
    return %c0_i32, %c0_i32_0 : i32, i32
  }
  func.func @transform_7(%arg0: i32) -> (i32, i32) {
    %c0_i32 = arith.constant 0 : i32
    %c0_i32_0 = arith.constant 0 : i32
    %c0_i32_1 = arith.constant 0 : i32
    return %c0_i32, %c0_i32_0 : i32, i32
  }
  func.func @transform_8(%arg0: i32) -> (i32, i32) {
    %c0_i32 = arith.constant 0 : i32
    %c0_i32_0 = arith.constant 0 : i32
    %c0_i32_1 = arith.constant 0 : i32
    return %c0_i32, %c0_i32_0 : i32, i32
  }
  func.func @transform_9(%arg0: i32) -> (i32, i32, i32) {
    %c0_i32 = arith.constant 0 : i32
    %c0_i32_0 = arith.constant 0 : i32
    %c0_i32_1 = arith.constant 0 : i32
    return %arg0, %c0_i32, %c0_i32_0 : i32, i32, i32
  }
}

</mosaic_0001>

<llo_original>
// kernel: tpu_custom_call.1
$region0: #{tpu_custom_call.1}
  #allocation0 [shape = 'u32[]', space=smem, size = 0x4, offset = 0x4, fixed_abs, tag = 'smem constant byte address 0x4 - core index']
  #allocation1 [shape = 'u32[144,128]{1,0:T(1,128)}', space=vmem, size = 0x12000, scoped, tag = 'internal scratch']
  #allocation2 [shape = 'f32[1,1]{1,0:T(1,128)S(1)}', space=vmem, size = 0x200, scoped, tag = 'scoped memory for tpu_custom_call.1']
  %s0 = inlined_call_operand.vmem [shape: f32[16,256], index: 0, kind: input, shape index: {}]
  %s1 = inlined_call_operand.vmem [shape: bf16[128,256], index: 1, kind: input, shape index: {}]
  %s2 = inlined_call_operand.vmem [shape: f32[128,1], index: 2, kind: input, shape index: {}]
  %s3 = inlined_call_operand.vmem [shape: bf16[64,128], index: 3, kind: input, shape index: {}]
  %s4 = inlined_call_operand.vmem [shape: f32[64,1], index: 4, kind: input, shape index: {}]
  %s5 = inlined_call_operand.vmem [shape: bf16[32,64], index: 5, kind: input, shape index: {}]
  %s6 = inlined_call_operand.vmem [shape: f32[32,1], index: 6, kind: input, shape index: {}]
  %s7 = inlined_call_operand.vmem [shape: f32[32,1], index: 7, kind: input, shape index: {}]
  %s8 = inlined_call_operand.<no memory space> [shape: f32[1,1], index: 8, kind: input, shape index: {}]
  %s9 = inlined_call_operand.hbm [shape: f32[1,1,128], index: 9, kind: output, shape index: {}]
  %s10 = sld [smem:[#allocation0]]
  $region46: #{tpu_custom_call.1} parent=0
    _
  %s12 = ssub.s32 1, %s10
  %s13 = scalar_select 0, %s12, %s10
  %v14 = vstv %s8
  %15 = vst [vmem:[#allocation2] sm:$0x1] %v14
  $region1: #{tpu_custom_call.1} parent=0
    #allocation3 [shape = 'u8[512]{0}', space=vmem, size = 0x400, scoped, tag = 'output window, operand 0, single buffered']
    #allocation4 [shape = 's32[1]{0}', space=sflag, size = 0x4, scoped, tag = 'scoped memory for tpu_custom_call.1']
    %16 = vsyncpa [#allocation4], 0
    // Predicated region
    $region2: #{tpu_custom_call.1} parent=1 // pred_check
      _
    $region3: #{tpu_custom_call.1} parent=1 // pred_check_branch
      %18 = sbr.rel (0) target = $region5
    $region4: #{tpu_custom_call.1} parent=1 // pred_region
      _
    $region5: #{tpu_custom_call.1} parent=1 // pred_fallthru
      _
    // Predicated region
    $region6: #{tpu_custom_call.1} parent=1 // pred_check
      _
    $region7: #{tpu_custom_call.1} parent=1 // pred_check_branch
      %20 = sbr.rel (0) target = $region9
    $region8: #{tpu_custom_call.1} parent=1 // pred_region
      _
    $region9: #{tpu_custom_call.1} parent=1 // pred_fallthru
      _
    // Predicated region
    $region10: #{tpu_custom_call.1} parent=1 // pred_check
      _
    $region11: #{tpu_custom_call.1} parent=1 // pred_check_branch
      %22 = sbr.rel (0) target = $region13
    $region12: #{tpu_custom_call.1} parent=1 // pred_region
      _
    $region13: #{tpu_custom_call.1} parent=1 // pred_fallthru
      _
    // Predicated region
    $region14: #{tpu_custom_call.1} parent=1 // pred_check
      _
    $region15: #{tpu_custom_call.1} parent=1 // pred_check_branch
      %24 = sbr.rel (0) target = $region17
    $region16: #{tpu_custom_call.1} parent=1 // pred_region
      _
    $region17: #{tpu_custom_call.1} parent=1 // pred_fallthru
      _
    // Predicated region
    $region18: #{tpu_custom_call.1} parent=1 // pred_check
      _
    $region19: #{tpu_custom_call.1} parent=1 // pred_check_branch
      %26 = sbr.rel (0) target = $region21
    $region20: #{tpu_custom_call.1} parent=1 // pred_region
      _
    $region21: #{tpu_custom_call.1} parent=1 // pred_fallthru
      _
    // Predicated region
    $region22: #{tpu_custom_call.1} parent=1 // pred_check
      _
    $region23: #{tpu_custom_call.1} parent=1 // pred_check_branch
      %28 = sbr.rel (0) target = $region25
    $region24: #{tpu_custom_call.1} parent=1 // pred_region
      _
    $region25: #{tpu_custom_call.1} parent=1 // pred_fallthru
      _
    // Predicated region
    $region26: #{tpu_custom_call.1} parent=1 // pred_check
      _
    $region27: #{tpu_custom_call.1} parent=1 // pred_check_branch
      %30 = sbr.rel (0) target = $region29
    $region28: #{tpu_custom_call.1} parent=1 // pred_region
      _
    $region29: #{tpu_custom_call.1} parent=1 // pred_fallthru
      _
    // Predicated region
    $region30: #{tpu_custom_call.1} parent=1 // pred_check
      _
    $region31: #{tpu_custom_call.1} parent=1 // pred_check_branch
      %32 = sbr.rel (0) target = $region33
    $region32: #{tpu_custom_call.1} parent=1 // pred_region
      _
    $region33: #{tpu_custom_call.1} parent=1 // pred_fallthru
      _
    // Predicated region
    $region34: #{tpu_custom_call.1} parent=1 // pred_check
      _
    $region35: #{tpu_custom_call.1} parent=1 // pred_check_branch
      %34 = sbr.rel (0) target = $region37
    $region36: #{tpu_custom_call.1} parent=1 // pred_region
      _
    $region37: #{tpu_custom_call.1} parent=1 // pred_fallthru
      _
    %v36 = vld [vmem:[%s0] sm:$0xff]
    %v37 = vld [vmem:[%s0 + $0x8] sm:$0xff]
    %v38 = vld [vmem:[%s0 + $0x10] sm:$0xff]
    %v39 = vld [vmem:[%s0 + $0x18] sm:$0xff]
    %v40 = vld [vmem:[%s0 + $0x20] sm:$0xff]
    %v41 = vld [vmem:[%s0 + $0x28] sm:$0xff]
    %v42 = vld [vmem:[%s0 + $0x30] sm:$0xff]
    %v43 = vld [vmem:[%s0 + $0x38] sm:$0xff]
    %v44 = vld [vmem:[%s0 + $0x40] sm:$0xff]
    %v45 = vld [vmem:[%s0 + $0x48] sm:$0xff]
    %v46 = vld [vmem:[%s0 + $0x50] sm:$0xff]
    %v47 = vld [vmem:[%s0 + $0x58] sm:$0xff]
    %v48 = vld [vmem:[%s0 + $0x60] sm:$0xff]
    %v49 = vld [vmem:[%s0 + $0x68] sm:$0xff]
    %v50 = vld [vmem:[%s0 + $0x70] sm:$0xff]
    %v51 = vld [vmem:[%s0 + $0x78] sm:$0xff]
    %v52 = vld [vmem:[%s0 + $0x80] sm:$0xff]
    %v53 = vld [vmem:[%s0 + $0x88] sm:$0xff]
    %v54 = vld [vmem:[%s0 + $0x90] sm:$0xff]
    %v55 = vld [vmem:[%s0 + $0x98] sm:$0xff]
    %v56 = vld [vmem:[%s0 + $0xa0] sm:$0xff]
    %v57 = vld [vmem:[%s0 + $0xa8] sm:$0xff]
    %v58 = vld [vmem:[%s0 + $0xb0] sm:$0xff]
    %v59 = vld [vmem:[%s0 + $0xb8] sm:$0xff]
    %v60 = vld [vmem:[%s0 + $0xc0] sm:$0xff]
    %v61 = vld [vmem:[%s0 + $0xc8] sm:$0xff]
    %v62 = vld [vmem:[%s0 + $0xd0] sm:$0xff]
    %v63 = vld [vmem:[%s0 + $0xd8] sm:$0xff]
    %v64 = vld [vmem:[%s0 + $0xe0] sm:$0xff]
    %v65 = vld [vmem:[%s0 + $0xe8] sm:$0xff]
    %v66 = vld [vmem:[%s0 + $0xf0] sm:$0xff]
    %v67 = vld [vmem:[%s0 + $0xf8] sm:$0xff]
    %v68 = vpack.c.bf16 %v38, %v36
    %v69 = vpack.c.bf16 %v39, %v37
    %v70 = vpack.c.bf16 %v42, %v40
    %v71 = vpack.c.bf16 %v43, %v41
    %v72 = vpack.c.bf16 %v46, %v44
    %v73 = vpack.c.bf16 %v47, %v45
    %v74 = vpack.c.bf16 %v50, %v48
    %v75 = vpack.c.bf16 %v51, %v49
    %v76 = vpack.c.bf16 %v54, %v52
    %v77 = vpack.c.bf16 %v55, %v53
    %v78 = vpack.c.bf16 %v58, %v56
    %v79 = vpack.c.bf16 %v59, %v57
    %v80 = vpack.c.bf16 %v62, %v60
    %v81 = vpack.c.bf16 %v63, %v61
    %v82 = vpack.c.bf16 %v66, %v64
    %v83 = vpack.c.bf16 %v67, %v65
    %v84 = vld [vmem:[%s1] sm:$0xff]
    %v85 = vld [vmem:[%s1 + $0x8] sm:$0xff]
    %v86 = vld [vmem:[%s1 + $0x10] sm:$0xff]
    %v87 = vld [vmem:[%s1 + $0x18] sm:$0xff]
    %v88 = vld [vmem:[%s1 + $0x20] sm:$0xff]
    %v89 = vld [vmem:[%s1 + $0x28] sm:$0xff]
    %v90 = vld [vmem:[%s1 + $0x30] sm:$0xff]
    %v91 = vld [vmem:[%s1 + $0x38] sm:$0xff]
    %v92 = vld [vmem:[%s1 + $0x40] sm:$0xff]
    %v93 = vld [vmem:[%s1 + $0x48] sm:$0xff]
    %v94 = vld [vmem:[%s1 + $0x50] sm:$0xff]
    %v95 = vld [vmem:[%s1 + $0x58] sm:$0xff]
    %v96 = vld [vmem:[%s1 + $0x60] sm:$0xff]
    %v97 = vld [vmem:[%s1 + $0x68] sm:$0xff]
    %v98 = vld [vmem:[%s1 + $0x70] sm:$0xff]
    %v99 = vld [vmem:[%s1 + $0x78] sm:$0xff]
    %v100 = vld [vmem:[%s2] sm:$0xff]
    %v101 = vld [vmem:[%s2 + $0x8] sm:$0xff]
    %v102 = vld [vmem:[%s2 + $0x10] sm:$0xff]
    %v103 = vld [vmem:[%s2 + $0x18] sm:$0xff]
    %v104 = vld [vmem:[%s2 + $0x20] sm:$0xff]
    %v105 = vld [vmem:[%s2 + $0x28] sm:$0xff]
    %v106 = vld [vmem:[%s2 + $0x30] sm:$0xff]
    %v107 = vld [vmem:[%s2 + $0x38] sm:$0xff]
    %v108 = vld [vmem:[%s2 + $0x40] sm:$0xff]
    %v109 = vld [vmem:[%s2 + $0x48] sm:$0xff]
    %v110 = vld [vmem:[%s2 + $0x50] sm:$0xff]
    %v111 = vld [vmem:[%s2 + $0x58] sm:$0xff]
    %v112 = vld [vmem:[%s2 + $0x60] sm:$0xff]
    %v113 = vld [vmem:[%s2 + $0x68] sm:$0xff]
    %v114 = vld [vmem:[%s2 + $0x70] sm:$0xff]
    %v115 = vld [vmem:[%s2 + $0x78] sm:$0xff]
    %117 = vset.pattern.permute.xlu0 0
    %118 = vperm.xlu0 %117, %v100
    %v119 = vpop.permute.xlu0 %118
    %122 = vset.pattern.permute.xlu0 0
    %123 = vperm.xlu0 %122, %v101
    %v124 = vpop.permute.xlu0 %123
    %127 = vset.pattern.permute.xlu0 0
    %128 = vperm.xlu0 %127, %v102
    %v129 = vpop.permute.xlu0 %128
    %132 = vset.pattern.permute.xlu0 0
    %133 = vperm.xlu0 %132, %v103
    %v134 = vpop.permute.xlu0 %133
    %137 = vset.pattern.permute.xlu0 0
    %138 = vperm.xlu0 %137, %v104
    %v139 = vpop.permute.xlu0 %138
    %142 = vset.pattern.permute.xlu0 0
    %143 = vperm.xlu0 %142, %v105
    %v144 = vpop.permute.xlu0 %143
    %147 = vset.pattern.permute.xlu0 0
    %148 = vperm.xlu0 %147, %v106
    %v149 = vpop.permute.xlu0 %148
    %152 = vset.pattern.permute.xlu0 0
    %153 = vperm.xlu0 %152, %v107
    %v154 = vpop.permute.xlu0 %153
    %157 = vset.pattern.permute.xlu0 0
    %158 = vperm.xlu0 %157, %v108
    %v159 = vpop.permute.xlu0 %158
    %162 = vset.pattern.permute.xlu0 0
    %163 = vperm.xlu0 %162, %v109
    %v164 = vpop.permute.xlu0 %163
    %167 = vset.pattern.permute.xlu0 0
    %168 = vperm.xlu0 %167, %v110
    %v169 = vpop.permute.xlu0 %168
    %172 = vset.pattern.permute.xlu0 0
    %173 = vperm.xlu0 %172, %v111
    %v174 = vpop.permute.xlu0 %173
    %177 = vset.pattern.permute.xlu0 0
    %178 = vperm.xlu0 %177, %v112
    %v179 = vpop.permute.xlu0 %178
    %182 = vset.pattern.permute.xlu0 0
    %183 = vperm.xlu0 %182, %v113
    %v184 = vpop.permute.xlu0 %183
    %187 = vset.pattern.permute.xlu0 0
    %188 = vperm.xlu0 %187, %v114
    %v189 = vpop.permute.xlu0 %188
    %192 = vset.pattern.permute.xlu0 0
    %193 = vperm.xlu0 %192, %v115
    %v194 = vpop.permute.xlu0 %193
    %v212 = vunpack.c.l.b16 %v84
    %v213 = vunpack.c.h.b16 %v84
    %v214 = vunpack.c.l.b16 %v85
    %v215 = vunpack.c.h.b16 %v85
    %v216 = vunpack.c.l.b16 %v86
    %v217 = vunpack.c.h.b16 %v86
    %v218 = vunpack.c.l.b16 %v87
    %v219 = vunpack.c.h.b16 %v87
    %v220 = vunpack.c.l.b16 %v88
    %v221 = vunpack.c.h.b16 %v88
    %v222 = vunpack.c.l.b16 %v89
    %v223 = vunpack.c.h.b16 %v89
    %v224 = vunpack.c.l.b16 %v90
    %v225 = vunpack.c.h.b16 %v90
    %v226 = vunpack.c.l.b16 %v91
    %v227 = vunpack.c.h.b16 %v91
    %v228 = vunpack.c.l.b16 %v92
    %v229 = vunpack.c.h.b16 %v92
    %v230 = vunpack.c.l.b16 %v93
    %v231 = vunpack.c.h.b16 %v93
    %v232 = vunpack.c.l.b16 %v94
    %v233 = vunpack.c.h.b16 %v94
    %v234 = vunpack.c.l.b16 %v95
    %v235 = vunpack.c.h.b16 %v95
    %v236 = vunpack.c.l.b16 %v96
    %v237 = vunpack.c.h.b16 %v96
    %v238 = vunpack.c.l.b16 %v97
    %v239 = vunpack.c.h.b16 %v97
    %v240 = vunpack.c.l.b16 %v98
    %v241 = vunpack.c.h.b16 %v98
    %v242 = vunpack.c.l.b16 %v99
    %v243 = vunpack.c.h.b16 %v99
    %v244 = vpack.c.b16 %v214, %v212
    %v245 = vpack.c.b16 %v215, %v213
    %v246 = vpack.c.b16 %v218, %v216
    %v247 = vpack.c.b16 %v219, %v217
    %v248 = vpack.c.b16 %v222, %v220
    %v249 = vpack.c.b16 %v223, %v221
    %v250 = vpack.c.b16 %v226, %v224
    %v251 = vpack.c.b16 %v227, %v225
    %v252 = vpack.c.b16 %v230, %v228
    %v253 = vpack.c.b16 %v231, %v229
    %v254 = vpack.c.b16 %v234, %v232
    %v255 = vpack.c.b16 %v235, %v233
    %v256 = vpack.c.b16 %v238, %v236
    %v257 = vpack.c.b16 %v239, %v237
    %v258 = vpack.c.b16 %v242, %v240
    %v259 = vpack.c.b16 %v243, %v241
    %276 = vmatprep.subr.bf16.mxu0 %v69
    %277 = vmatpush1.bf16.xpose.msra.mxu0 %v68
    %278 = vmatprep.subr.bf16.mxu0 %v71
    %279 = vmatpush1.bf16.xpose.msra.mxu0 %v70
    %280 = vmatprep.subr.bf16.mxu0 %v73
    %281 = vmatpush1.bf16.xpose.msra.mxu0 %v72
    %282 = vmatprep.subr.bf16.mxu0 %v75
    %283 = vmatpush1.bf16.xpose.msra.mxu0 %v74
    %284 = vmatprep.subr.bf16.mxu0 %v77
    %285 = vmatpush1.bf16.xpose.msra.mxu0 %v76
    %286 = vmatprep.subr.bf16.mxu0 %v79
    %287 = vmatpush1.bf16.xpose.msra.mxu0 %v78
    %288 = vmatprep.subr.bf16.mxu0 %v81
    %289 = vmatpush1.bf16.xpose.msra.mxu0 %v80
    %290 = vmatprep.subr.bf16.mxu0 %v83
    %291 = vmatpush1.bf16.xpose.msra.mxu0 %v82
    %292 = vmatprep.subr.bf16.mxu0 0
    %293 = vmatpush1.bf16.xpose.msra.mxu0 0
    %294 = vmatprep.subr.bf16.mxu0 0
    %295 = vmatpush1.bf16.xpose.msra.mxu0 0
    %296 = vmatprep.subr.bf16.mxu0 0
    %297 = vmatpush1.bf16.xpose.msra.mxu0 0
    %298 = vmatprep.subr.bf16.mxu0 0
    %299 = vmatpush1.bf16.xpose.msra.mxu0 0
    %300 = vmatprep.subr.bf16.mxu0 0
    %301 = vmatpush1.bf16.xpose.msra.mxu0 0
    %302 = vmatprep.subr.bf16.mxu0 0
    %303 = vmatpush1.bf16.xpose.msra.mxu0 0
    %304 = vmatprep.subr.bf16.mxu0 0
    %305 = vmatpush1.bf16.xpose.msra.mxu0 0
    %306 = vmatprep.subr.bf16.mxu0 0
    %307 = vmatpush1.bf16.xpose.msra.mxu0 0
    %308 = vmatprep.mubr.bf16.mxu0 %v245
    %309 = vmatmul.mubr.bf16.gmra.mrb[0].mxu0 %v244
    %v310 = vpop.f32.mrb[0].mxu0
    %v311 = vadd.f32 %v119, %v310
    %v312 = vpop.f32.mrb[0].mxu0
    %v313 = vpop.f32.mrb[0].mxu0
    %v314 = vadd.f32 %v124, %v313
    %v315 = vpop.f32.mrb[0].mxu0
    %316 = vmatprep.mubr.bf16.mxu0 %v247
    %317 = vmatmul.mubr.bf16.gmra.mrb[0].mxu0 %v246
    %v318 = vpop.f32.mrb[0].mxu0
    %v319 = vadd.f32 %v129, %v318
    %v320 = vpop.f32.mrb[0].mxu0
    %v321 = vpop.f32.mrb[0].mxu0
    %v322 = vadd.f32 %v134, %v321
    %v323 = vpop.f32.mrb[0].mxu0
    %324 = vmatprep.mubr.bf16.mxu0 %v249
    %325 = vmatmul.mubr.bf16.gmra.mrb[0].mxu0 %v248
    %v326 = vpop.f32.mrb[0].mxu0
    %v327 = vadd.f32 %v139, %v326
    %v328 = vpop.f32.mrb[0].mxu0
    %v329 = vpop.f32.mrb[0].mxu0
    %v330 = vadd.f32 %v144, %v329
    %v331 = vpop.f32.mrb[0].mxu0
    %332 = vmatprep.mubr.bf16.mxu0 %v251
    %333 = vmatmul.mubr.bf16.gmra.mrb[0].mxu0 %v250
    %v334 = vpop.f32.mrb[0].mxu0
    %v335 = vadd.f32 %v149, %v334
    %v336 = vpop.f32.mrb[0].mxu0
    %v337 = vpop.f32.mrb[0].mxu0
    %v338 = vadd.f32 %v154, %v337
    %v339 = vpop.f32.mrb[0].mxu0
    %340 = vmatprep.mubr.bf16.mxu0 %v253
    %341 = vmatmul.mubr.bf16.gmra.mrb[0].mxu0 %v252
    %v342 = vpop.f32.mrb[0].mxu0
    %v343 = vadd.f32 %v159, %v342
    %v344 = vpop.f32.mrb[0].mxu0
    %v345 = vpop.f32.mrb[0].mxu0
    %v346 = vadd.f32 %v164, %v345
    %v347 = vpop.f32.mrb[0].mxu0
    %348 = vmatprep.mubr.bf16.mxu0 %v255
    %349 = vmatmul.mubr.bf16.gmra.mrb[0].mxu0 %v254
    %v350 = vpop.f32.mrb[0].mxu0
    %v351 = vadd.f32 %v169, %v350
    %v352 = vpop.f32.mrb[0].mxu0
    %v353 = vpop.f32.mrb[0].mxu0
    %v354 = vadd.f32 %v174, %v353
    %v355 = vpop.f32.mrb[0].mxu0
    %356 = vmatprep.mubr.bf16.mxu0 %v257
    %357 = vmatmul.mubr.bf16.gmra.mrb[0].mxu0 %v256
    %v358 = vpop.f32.mrb[0].mxu0
    %v359 = vadd.f32 %v179, %v358
    %v360 = vpop.f32.mrb[0].mxu0
    %v361 = vpop.f32.mrb[0].mxu0
    %v362 = vadd.f32 %v184, %v361
    %v363 = vpop.f32.mrb[0].mxu0
    %364 = vmatprep.mubr.bf16.mxu0 %v259
    %365 = vmatmul.mubr.bf16.gmra.mrb[0].mxu0 %v258
    %v366 = vpop.f32.mrb[0].mxu0
    %v367 = vadd.f32 %v189, %v366
    %v368 = vpop.f32.mrb[0].mxu0
    %v369 = vpop.f32.mrb[0].mxu0
    %v370 = vadd.f32 %v194, %v369
    %v371 = vpop.f32.mrb[0].mxu0
    %372 = vdwg.mxu0
    %v373 = vmax.f32 %v311, 0.0
    %v374 = vmax.f32 %v314, 0.0
    %v375 = vmax.f32 %v319, 0.0
    %v376 = vmax.f32 %v322, 0.0
    %v377 = vmax.f32 %v327, 0.0
    %v378 = vmax.f32 %v330, 0.0
    %v379 = vmax.f32 %v335, 0.0
    %v380 = vmax.f32 %v338, 0.0
    %v381 = vmax.f32 %v343, 0.0
    %v382 = vmax.f32 %v346, 0.0
    %v383 = vmax.f32 %v351, 0.0
    %v384 = vmax.f32 %v354, 0.0
    %v385 = vmax.f32 %v359, 0.0
    %v386 = vmax.f32 %v362, 0.0
    %v387 = vmax.f32 %v367, 0.0
    %v388 = vmax.f32 %v370, 0.0
    %v389 = vpack.c.bf16 %v374, %v373
    %v390 = vpack.c.bf16 %v376, %v375
    %v391 = vpack.c.bf16 %v378, %v377
    %v392 = vpack.c.bf16 %v380, %v379
    %v393 = vpack.c.bf16 %v382, %v381
    %v394 = vpack.c.bf16 %v384, %v383
    %v395 = vpack.c.bf16 %v386, %v385
    %v396 = vpack.c.bf16 %v388, %v387
    %v397 = vld [vmem:[%s3] sm:$0xf]
    %v398 = vld [vmem:[%s3 + $0x4] sm:$0xf]
    %v399 = vld [vmem:[%s3 + $0x8] sm:$0xf]
    %v400 = vld [vmem:[%s3 + $0xc] sm:$0xf]
    %v401 = vld [vmem:[%s3 + $0x10] sm:$0xf]
    %v402 = vld [vmem:[%s3 + $0x14] sm:$0xf]
    %v403 = vld [vmem:[%s3 + $0x18] sm:$0xf]
    %v404 = vld [vmem:[%s3 + $0x1c] sm:$0xf]
    %v405 = vld [vmem:[%s4] sm:$0xff]
    %v406 = vld [vmem:[%s4 + $0x8] sm:$0xff]
    %v407 = vld [vmem:[%s4 + $0x10] sm:$0xff]
    %v408 = vld [vmem:[%s4 + $0x18] sm:$0xff]
    %v409 = vld [vmem:[%s4 + $0x20] sm:$0xff]
    %v410 = vld [vmem:[%s4 + $0x28] sm:$0xff]
    %v411 = vld [vmem:[%s4 + $0x30] sm:$0xff]
    %v412 = vld [vmem:[%s4 + $0x38] sm:$0xff]
    %414 = vset.pattern.permute.xlu0 0
    %415 = vperm.xlu0 %414, %v405
    %v416 = vpop.permute.xlu0 %415
    %419 = vset.pattern.permute.xlu0 0
    %420 = vperm.xlu0 %419, %v406
    %v421 = vpop.permute.xlu0 %420
    %424 = vset.pattern.permute.xlu0 0
    %425 = vperm.xlu0 %424, %v407
    %v426 = vpop.permute.xlu0 %425
    %429 = vset.pattern.permute.xlu0 0
    %430 = vperm.xlu0 %429, %v408
    %v431 = vpop.permute.xlu0 %430
    %434 = vset.pattern.permute.xlu0 0
    %435 = vperm.xlu0 %434, %v409
    %v436 = vpop.permute.xlu0 %435
    %439 = vset.pattern.permute.xlu0 0
    %440 = vperm.xlu0 %439, %v410
    %v441 = vpop.permute.xlu0 %440
    %444 = vset.pattern.permute.xlu0 0
    %445 = vperm.xlu0 %444, %v411
    %v446 = vpop.permute.xlu0 %445
    %449 = vset.pattern.permute.xlu0 0
    %450 = vperm.xlu0 %449, %v412
    %v451 = vpop.permute.xlu0 %450
    %v461 = vunpack.c.l.b16 %v397
    %v462 = vunpack.c.l.b16 %v398
    %v463 = vunpack.c.l.b16 %v399
    %v464 = vunpack.c.l.b16 %v400
    %v465 = vunpack.c.l.b16 %v401
    %v466 = vunpack.c.l.b16 %v402
    %v467 = vunpack.c.l.b16 %v403
    %v468 = vunpack.c.l.b16 %v404
    %v469 = vpack.c.b16 %v462, %v461
    %v470 = vpack.c.b16 %v464, %v463
    %v471 = vpack.c.b16 %v466, %v465
    %v472 = vpack.c.b16 %v468, %v467
    %477 = vmatprep.subr.bf16.mxu0 0
    %478 = vmatpush1.bf16.msra.mxu0 %v389
    %479 = vmatprep.subr.bf16.mxu0 0
    %480 = vmatpush1.bf16.msra.mxu0 %v390
    %481 = vmatprep.subr.bf16.mxu0 0
    %482 = vmatpush1.bf16.msra.mxu0 %v391
    %483 = vmatprep.subr.bf16.mxu0 0
    %484 = vmatpush1.bf16.msra.mxu0 %v392
    %485 = vmatprep.subr.bf16.mxu0 0
    %486 = vmatpush1.bf16.msra.mxu0 %v393
    %487 = vmatprep.subr.bf16.mxu0 0
    %488 = vmatpush1.bf16.msra.mxu0 %v394
    %489 = vmatprep.subr.bf16.mxu0 0
    %490 = vmatpush1.bf16.msra.mxu0 %v395
    %491 = vmatprep.subr.bf16.mxu0 0
    %492 = vmatpush1.bf16.msra.mxu0 %v396
    %493 = vmatprep.subr.bf16.mxu0 0
    %494 = vmatpush1.bf16.msra.mxu0 0
    %495 = vmatprep.subr.bf16.mxu0 0
    %496 = vmatpush1.bf16.msra.mxu0 0
    %497 = vmatprep.subr.bf16.mxu0 0
    %498 = vmatpush1.bf16.msra.mxu0 0
    %499 = vmatprep.subr.bf16.mxu0 0
    %500 = vmatpush1.bf16.msra.mxu0 0
    %501 = vmatprep.subr.bf16.mxu0 0
    %502 = vmatpush1.bf16.msra.mxu0 0
    %503 = vmatprep.subr.bf16.mxu0 0
    %504 = vmatpush1.bf16.msra.mxu0 0
    %505 = vmatprep.subr.bf16.mxu0 0
    %506 = vmatpush1.bf16.msra.mxu0 0
    %507 = vmatprep.subr.bf16.mxu0 0
    %508 = vmatpush1.bf16.msra.mxu0 0
    %509 = vmatprep.mubr.bf16.mxu0 0
    %510 = vmatmul.mubr.bf16.gmra.mrb[0].mxu0 %v469
    %v511 = vpop.f32.mrb[0].mxu0
    %v512 = vadd.f32 %v416, %v511
    %v513 = vpop.f32.mrb[0].mxu0
    %v514 = vpop.f32.mrb[0].mxu0
    %v515 = vadd.f32 %v421, %v514
    %v516 = vpop.f32.mrb[0].mxu0
    %517 = vmatprep.mubr.bf16.mxu0 0
    %518 = vmatmul.mubr.bf16.gmra.mrb[0].mxu0 %v470
    %v519 = vpop.f32.mrb[0].mxu0
    %v520 = vadd.f32 %v426, %v519
    %v521 = vpop.f32.mrb[0].mxu0
    %v522 = vpop.f32.mrb[0].mxu0
    %v523 = vadd.f32 %v431, %v522
    %v524 = vpop.f32.mrb[0].mxu0
    %525 = vmatprep.mubr.bf16.mxu0 0
    %526 = vmatmul.mubr.bf16.gmra.mrb[0].mxu0 %v471
    %v527 = vpop.f32.mrb[0].mxu0
    %v528 = vadd.f32 %v436, %v527
    %v529 = vpop.f32.mrb[0].mxu0
    %v530 = vpop.f32.mrb[0].mxu0
    %v531 = vadd.f32 %v441, %v530
    %v532 = vpop.f32.mrb[0].mxu0
    %533 = vmatprep.mubr.bf16.mxu0 0
    %534 = vmatmul.mubr.bf16.gmra.mrb[0].mxu0 %v472
    %v535 = vpop.f32.mrb[0].mxu0
    %v536 = vadd.f32 %v446, %v535
    %v537 = vpop.f32.mrb[0].mxu0
    %v538 = vpop.f32.mrb[0].mxu0
    %v539 = vadd.f32 %v451, %v538
    %v540 = vpop.f32.mrb[0].mxu0
    %541 = vdwg.mxu0
    %v542 = vmax.f32 %v512, 0.0
    %v543 = vmax.f32 %v515, 0.0
    %v544 = vmax.f32 %v520, 0.0
    %v545 = vmax.f32 %v523, 0.0
    %v546 = vmax.f32 %v528, 0.0
    %v547 = vmax.f32 %v531, 0.0
    %v548 = vmax.f32 %v536, 0.0
    %v549 = vmax.f32 %v539, 0.0
    %v550 = vpack.c.bf16 %v543, %v542
    %v551 = vpack.c.bf16 %v545, %v544
    %v552 = vpack.c.bf16 %v547, %v546
    %v553 = vpack.c.bf16 %v549, %v548
    %v554 = vld [vmem:[%s5] sm:$0xf]
    %v555 = vld [vmem:[%s5 + $0x4] sm:$0xf]
    %v556 = vld [vmem:[%s5 + $0x8] sm:$0xf]
    %v557 = vld [vmem:[%s5 + $0xc] sm:$0xf]
    %v558 = vld [vmem:[%s6] sm:$0xff]
    %v559 = vld [vmem:[%s6 + $0x8] sm:$0xff]
    %v560 = vld [vmem:[%s6 + $0x10] sm:$0xff]
    %v561 = vld [vmem:[%s6 + $0x18] sm:$0xff]
    %563 = vset.pattern.permute.xlu0 0
    %564 = vperm.xlu0 %563, %v558
    %v565 = vpop.permute.xlu0 %564
    %568 = vset.pattern.permute.xlu0 0
    %569 = vperm.xlu0 %568, %v559
    %v570 = vpop.permute.xlu0 %569
    %573 = vset.pattern.permute.xlu0 0
    %574 = vperm.xlu0 %573, %v560
    %v575 = vpop.permute.xlu0 %574
    %578 = vset.pattern.permute.xlu0 0
    %579 = vperm.xlu0 %578, %v561
    %v580 = vpop.permute.xlu0 %579
    %v586 = vunpack.c.l.b16 %v554
    %v587 = vunpack.c.l.b16 %v555
    %v588 = vunpack.c.l.b16 %v556
    %v589 = vunpack.c.l.b16 %v557
    %v590 = vpack.c.b16 %v587, %v586
    %v591 = vpack.c.b16 %v589, %v588
    %vm592 = vcmask 523264
    %v594 = vsel %vm592, %v590, 0
    %v597 = vsel %vm592, %v591, 0
    %599 = vmatprep.subr.bf16.mxu0 0
    %600 = vmatpush1.bf16.msra.mxu0 %v550
    %601 = vmatprep.subr.bf16.mxu0 0
    %602 = vmatpush1.bf16.msra.mxu0 %v551
    %603 = vmatprep.subr.bf16.mxu0 0
    %604 = vmatpush1.bf16.msra.mxu0 %v552
    %605 = vmatprep.subr.bf16.mxu0 0
    %606 = vmatpush1.bf16.msra.mxu0 %v553
    %607 = vmatprep.subr.bf16.mxu0 0
    %608 = vmatpush1.bf16.msra.mxu0 0
    %609 = vmatprep.subr.bf16.mxu0 0
    %610 = vmatpush1.bf16.msra.mxu0 0
    %611 = vmatprep.subr.bf16.mxu0 0
    %612 = vmatpush1.bf16.msra.mxu0 0
    %613 = vmatprep.subr.bf16.mxu0 0
    %614 = vmatpush1.bf16.msra.mxu0 0
    %615 = vmatprep.subr.bf16.mxu0 0
    %616 = vmatpush1.bf16.msra.mxu0 0
    %617 = vmatprep.subr.bf16.mxu0 0
    %618 = vmatpush1.bf16.msra.mxu0 0
    %619 = vmatprep.subr.bf16.mxu0 0
    %620 = vmatpush1.bf16.msra.mxu0 0
    %621 = vmatprep.subr.bf16.mxu0 0
    %622 = vmatpush1.bf16.msra.mxu0 0
    %623 = vmatprep.subr.bf16.mxu0 0
    %624 = vmatpush1.bf16.msra.mxu0 0
    %625 = vmatprep.subr.bf16.mxu0 0
    %626 = vmatpush1.bf16.msra.mxu0 0
    %627 = vmatprep.subr.bf16.mxu0 0
    %628 = vmatpush1.bf16.msra.mxu0 0
    %629 = vmatprep.subr.bf16.mxu0 0
    %630 = vmatpush1.bf16.msra.mxu0 0
    %631 = vmatprep.mubr.bf16.mxu0 0
    %632 = vmatmul.mubr.bf16.gmra.mrb[0].mxu0 %v594
    %v633 = vpop.f32.mrb[0].mxu0
    %v634 = vadd.f32 %v565, %v633
    %v635 = vpop.f32.mrb[0].mxu0
    %v636 = vpop.f32.mrb[0].mxu0
    %v637 = vadd.f32 %v570, %v636
    %v638 = vpop.f32.mrb[0].mxu0
    %639 = vmatprep.mubr.bf16.mxu0 0
    %640 = vmatmul.mubr.bf16.gmra.mrb[0].mxu0 %v597
    %v641 = vpop.f32.mrb[0].mxu0
    %v642 = vadd.f32 %v575, %v641
    %v643 = vpop.f32.mrb[0].mxu0
    %v644 = vpop.f32.mrb[0].mxu0
    %v645 = vadd.f32 %v580, %v644
    %v646 = vpop.f32.mrb[0].mxu0
    %647 = vdwg.mxu0
    %v648 = vmax.f32 %v634, 0.0
    %v649 = vmax.f32 %v637, 0.0
    %v650 = vmax.f32 %v642, 0.0
    %v651 = vmax.f32 %v645, 0.0
    %v652 = vld [vmem:[%s7] sm:$0xff]
    %v653 = vld [vmem:[%s7 + $0x8] sm:$0xff]
    %v654 = vld [vmem:[%s7 + $0x10] sm:$0xff]
    %v655 = vld [vmem:[%s7 + $0x18] sm:$0xff]
    %657 = vset.pattern.permute.xlu0 0
    %658 = vperm.xlu0 %657, %v652
    %v659 = vpop.permute.xlu0 %658
    %662 = vset.pattern.permute.xlu0 0
    %663 = vperm.xlu0 %662, %v653
    %v664 = vpop.permute.xlu0 %663
    %667 = vset.pattern.permute.xlu0 0
    %668 = vperm.xlu0 %667, %v654
    %v669 = vpop.permute.xlu0 %668
    %672 = vset.pattern.permute.xlu0 0
    %673 = vperm.xlu0 %672, %v655
    %v674 = vpop.permute.xlu0 %673
    %v676 = vmul.f32 %v648, %v659
    %v677 = vmul.f32 %v649, %v664
    %v678 = vmul.f32 %v650, %v669
    %v679 = vmul.f32 %v651, %v674
    %v680 = vadd.f32 %v676, %v677
    %v681 = vadd.f32 %v680, %v678
    %v682 = vadd.f32 %v681, %v679
    %v683 = vrot.slane %v682, 4
    %v684 = vadd.f32 %v682, %v683
    %v685 = vrot.slane %v684, 2
    %v686 = vadd.f32 %v684, %v685
    %v687 = vrot.slane %v686, 1
    %v688 = vadd.f32 %v686, %v687
    %v689 = vld [vmem:[#allocation2] sm:$0x1]
    %691 = vset.pattern.permute.xlu0 0
    %692 = vperm.xlu0 %691, %v689
    %v693 = vpop.permute.xlu0 %692
    %v695 = vlaneseq
    %v696 = vshrl.u32 %v695, 7
    %v697 = vsub.s32 0, %v696
    %v698 = vrot.slane %v693, %v697
    %v699 = vadd.f32 %v688, %v698
    %700 = vst [vmem:[#allocation3] sm:$0x1] %v699
    // Predicated region
    $region38: #{tpu_custom_call.1} parent=1 // pred_check
      _
    $region39: #{tpu_custom_call.1} parent=1 // pred_check_branch
      %702 = sbr.rel (0) target = $region41
    $region40: #{tpu_custom_call.1} parent=1 // pred_region
      %s704 = ssub.s32 16, 16
      %705 = vsyncadd [#allocation4], %s704
      %s707 = sshll.u32 [#allocation3], 4
      %s708 = int_to_ptr.vmem [resolvable:$true] %s707
      %710 = dma.vmem_to_hbm [thread:$0]  %s708, 16, %s9, [#allocation4]
    $region41: #{tpu_custom_call.1} parent=1 // pred_fallthru
      _
    // Predicated region
    $region42: #{tpu_custom_call.1} parent=1 // pred_check
      _
    $region43: #{tpu_custom_call.1} parent=1 // pred_check_branch
      %712 = sbr.rel (0) target = $region45
    $region44: #{tpu_custom_call.1} parent=1 // pred_region
      %713 = dma.done [#allocation4], 16
    $region45: #{tpu_custom_call.1} parent=1 // pred_fallthru
      _
    %714 = vsyncpa [#allocation4], 1

</llo_original>
